<compile_context>
chip_gen: v7x
topology: tpu7x:2x2x1
jax: 0.10.0
libtpu: 0.0.40
codegen_flags: <defaults>
</compile_context>

<pallas_src>
import functools

import jax
import jax.numpy as jnp
from jax.experimental import pallas as pl
from jax.experimental.pallas import tpu as pltpu

LANE = 128       # full vreg lane width
OUT_LANES = 64   # packed output width: [enc(40) | s_hat(1) | y_hat(2) | pad]


def _ru8(n: int) -> int:
    return (n + 7) // 8 * 8


# ----------------------------------------------------------------------------
# Kernel: whole forward pass, single packed-weight input, packed 64-lane output.
# ----------------------------------------------------------------------------
def _model_fwd_kernel(x_ref, w_ref, out_ref, *, dims):
    (d_in, H, S, P, C, col_s, col_p, col_y,
     r_we, r_be, r_wap, r_bap, r_wp1, r_bp1) = dims

    x = x_ref[...]                                   # [TB, d_in] f32

    # Row (sublane) slices of the packed weight buffer; offsets are 8-aligned
    # and every slab spans the full 128 lanes -> unmasked vld, clean vmatmul.
    w_e = w_ref[r_we:r_we + d_in, :]                 # [d_in, 128]
    b_e = w_ref[r_be:r_be + 1, :]                    # [1, 128]
    w_ap = w_ref[r_wap:r_wap + LANE, :]              # [128, 128]
    b_ap = w_ref[r_bap:r_bap + 1, :]                 # [1, 128]
    w_p1 = w_ref[r_wp1:r_wp1 + LANE, :]              # [128, 128]
    b_p1 = w_ref[r_bp1:r_bp1 + 1, :]                 # [1, 128]

    # Layer 1 (encoder): lanes 0:H are real; lanes >= H become sigmoid(0)=0.5
    # but only ever multiply zero rows of w_ap, so they contribute nothing.
    h = jax.nn.sigmoid(
        jnp.dot(x, w_e, preferred_element_type=jnp.float32) + b_e)       # [TB, 128]

    # Layer 2: adversary (lane col_s) + predictor hidden (lanes col_p:col_p+P)
    # fused into one full-width MXU push. Rows >= H of w_ap are zero.
    sp = jax.nn.sigmoid(
        jnp.dot(h, w_ap, preferred_element_type=jnp.float32) + b_ap)     # [TB, 128]

    # Layer 3: predictor logits at lanes col_y:col_y+C. Rows of w_p1 outside
    # col_p:col_p+P are zero, so the 0.5 junk lanes of sp drop out exactly.
    logits = jnp.dot(sp, w_p1, preferred_element_type=jnp.float32) + b_p1  # [TB, 128]

    # Slice-stores (no concatenate, no zero-pad materialization). Output lanes
    # past H+S+C are never read by the wrapper, so they stay unwritten.
    out_ref[:, 0:H] = h[:, 0:H]
    out_ref[:, H:H + S] = sp[:, col_s:col_s + S]

    if C == 2:
        # 2-class softmax == sigmoid of the logit difference (exact identity,
        # EUP only; no XLU reduction).
        y0 = jax.nn.sigmoid(
            logits[:, col_y:col_y + 1] - logits[:, col_y + 1:col_y + 2])
        out_ref[:, H + S:H + S + 1] = y0
        out_ref[:, H + S + 1:H + S + 2] = 1.0 - y0
    else:
        lg = logits[:, col_y:col_y + C]
        m = jnp.max(lg, axis=-1, keepdims=True)
        e = jnp.exp(lg - m)
        out_ref[:, H + S:H + S + C] = e * pl.reciprocal(
            jnp.sum(e, axis=-1, keepdims=True))


# ----------------------------------------------------------------------------
# Host-side packing of the 8 parameter tensors into one padded VMEM buffer.
# Each logical weight occupies a full 128-lane, zero-padded slab.
# ----------------------------------------------------------------------------
def pack_params(params):
    w_e0, b_e0 = params["w_e0"], params["b_e0"]
    w_a0, b_a0 = params["w_a0"], params["b_a0"]
    w_p0, b_p0 = params["w_p0"], params["b_p0"]
    w_p1, b_p1 = params["w_p1"], params["b_p1"]

    d_in, H = w_e0.shape
    S = w_a0.shape[1]
    P = w_p0.shape[1]
    C = w_p1.shape[1]
    assert H + S + C <= OUT_LANES
    assert max(d_in, H, C) <= LANE

    # Lane placement inside the fused layer-2 output / layer-3 slabs.
    col_s = 0                    # adversary output lane(s)
    col_p = _ru8(col_s + S)      # predictor hidden lanes
    col_y = 0                    # logit lanes in the layer-3 output
    assert col_p + P <= LANE

    # Row placement (8-aligned so in-kernel row slices are sublane-aligned).
    r_we = 0
    r_be = _ru8(r_we + d_in)
    r_wap = _ru8(r_be + 1)
    r_bap = r_wap + LANE
    r_wp1 = _ru8(r_bap + 1)
    r_bp1 = r_wp1 + LANE
    rows = _ru8(r_bp1 + 1)

    buf = jnp.zeros((rows, LANE), jnp.float32)
    # Layer 1 (encoder): lanes 0:H.
    buf = buf.at[r_we:r_we + d_in, 0:H].set(w_e0)
    buf = buf.at[r_be, 0:H].set(b_e0.reshape(H))
    # Layer 2 (adversary | predictor hidden): only rows 0:H are non-zero, and
    # bias pad lanes stay 0 so sigmoid(pad)=0.5 only hits zero rows of w_p1.
    buf = buf.at[r_wap:r_wap + H, col_s:col_s + S].set(w_a0)
    buf = buf.at[r_wap:r_wap + H, col_p:col_p + P].set(w_p0)
    buf = buf.at[r_bap, col_s:col_s + S].set(b_a0.reshape(S))
    buf = buf.at[r_bap, col_p:col_p + P].set(b_p0.reshape(P))
    # Layer 3 (predictor output): only rows col_p:col_p+P are non-zero.
    buf = buf.at[r_wp1 + col_p:r_wp1 + col_p + P, col_y:col_y + C].set(w_p1)
    buf = buf.at[r_bp1, col_y:col_y + C].set(b_p1.reshape(C))

    dims = (d_in, H, S, P, C, col_s, col_p, col_y,
            r_we, r_be, r_wap, r_bap, r_wp1, r_bp1)
    return buf, dims


def _forward_packed(x, buf, dims, *, batch_tile=8192):
    B, d_in = x.shape
    assert dims[0] == d_in
    H, S, C = dims[1], dims[2], dims[4]

    # Batch tiling: whole batch resident when small; otherwise split so the
    # "parallel" grid has >= 2 steps (engages both v7x TensorCores), capped at
    # batch_tile rows to keep the per-step VMEM footprint modest.
    if B <= batch_tile // 2:
        TB = B
    else:
        TB = min(batch_tile, _ru8(pl.cdiv(B, 2)))
    grid = (pl.cdiv(B, TB),)

    kernel = functools.partial(_model_fwd_kernel, dims=dims)

    out = pl.pallas_call(
        kernel,
        out_shape=jax.ShapeDtypeStruct((B, OUT_LANES), jnp.float32),
        grid=grid,
        in_specs=[
            pl.BlockSpec((TB, d_in), lambda i: (i, 0)),
            pl.BlockSpec(buf.shape, lambda i: (0, 0)),   # weights resident
        ],
        out_specs=pl.BlockSpec((TB, OUT_LANES), lambda i: (i, 0)),
        compiler_params=pltpu.CompilerParams(
            dimension_semantics=("parallel",),
            # v5e's default scoped VMEM is only 16 MiB; raise it so the large
            # batch tile compiles everywhere (48 MiB is safe on v5e/v6e/v7x).
            vmem_limit_bytes=48 * 1024 * 1024,
        ),
    )(x, buf)

    encoded = out[:, 0:H]
    s_hat = out[:, H:H + S]
    y_hat = out[:, H + S:H + S + C]
    return encoded, s_hat, y_hat


def build_forward(params, *, batch_tile=8192):
    """Pack parameters once, return a jitted forward(x) closure."""
    buf, dims = pack_params(params)
    fwd = functools.partial(_forward_packed, buf=buf, dims=dims,
                            batch_tile=batch_tile)
    return jax.jit(fwd)


def model_forward(x, params, *, batch_tile=8192):
    """One-off convenience (re-packs each call); prefer build_forward()."""
    buf, dims = pack_params(params)
    return _forward_packed(x, buf, dims, batch_tile=batch_tile)


# ----------------------------------------------------------------------------
# Deterministic parameter construction (PyTorch Linear-style uniform init).
# ----------------------------------------------------------------------------
def _linear_params(key, fan_in, fan_out):
    kw, kb = jax.random.split(key)
    bound = 1.0 / jnp.sqrt(jnp.float32(fan_in))
    w = jax.random.uniform(kw, (fan_in, fan_out), jnp.float32, -bound, bound)
    b = jax.random.uniform(kb, (1, fan_out), jnp.float32, -bound, bound)
    return w, b


def make_params(key, d_in=32, hidden=40, pred_hidden=20, s_size=1, n_classes=2):
    keys = jax.random.split(key, 4)
    w_e0, b_e0 = _linear_params(keys[0], d_in, hidden)
    w_a0, b_a0 = _linear_params(keys[1], hidden, s_size)
    w_p0, b_p0 = _linear_params(keys[2], hidden, pred_hidden)
    w_p1, b_p1 = _linear_params(keys[3], pred_hidden, n_classes)
    return dict(
        w_e0=w_e0, b_e0=b_e0,
        w_a0=w_a0, b_a0=b_a0,
        w_p0=w_p0, b_p0=b_p0,
        w_p1=w_p1, b_p1=b_p1,
    )


def _reference_forward(x, params):
    h = jax.nn.sigmoid(x @ params["w_e0"] + params["b_e0"])
    s = jax.nn.sigmoid(h @ params["w_a0"] + params["b_a0"])
    p = jax.nn.sigmoid(h @ params["w_p0"] + params["b_p0"])
    logits = p @ params["w_p1"] + params["b_p1"]
    return h, s, jax.nn.softmax(logits, axis=-1)


if __name__ == "__main__":
    key = jax.random.PRNGKey(0)
    kx, kp, kx2 = jax.random.split(key, 3)

    B, D_IN = 8, 32
    x = jax.random.normal(kx, (B, D_IN), jnp.float32)
    params = make_params(kp, d_in=D_IN)

    # Primary (small-batch) check: pack once, jitted forward.
    fwd = build_forward(params)
    encoded, s_hat, y_hat = fwd(x)
    jax.block_until_ready((encoded, s_hat, y_hat))

    ref_enc, ref_s, ref_y = _reference_forward(x, params)
    assert encoded.shape == (B, 40) and s_hat.shape == (B, 1) and y_hat.shape == (B, 2)
    assert jnp.allclose(encoded, ref_enc, atol=1e-5)
    assert jnp.allclose(s_hat, ref_s, atol=1e-5)
    assert jnp.allclose(y_hat, ref_y, atol=1e-5)

    # Secondary check: multi-step parallel grid with a partial last block
    # (B % TB != 0) to exercise the tiled path explicitly.
    B2 = 300
    x2 = jax.random.normal(kx2, (B2, D_IN), jnp.float32)
    fwd_tiled = build_forward(params, batch_tile=128)
    enc2, s2, y2 = fwd_tiled(x2)
    jax.block_until_ready((enc2, s2, y2))
    r_enc2, r_s2, r_y2 = _reference_forward(x2, params)
    assert jnp.allclose(enc2, r_enc2, atol=1e-5)
    assert jnp.allclose(s2, r_s2, atol=1e-5)
    assert jnp.allclose(y2, r_y2, atol=1e-5)

    print("KERNEL_OK")
</pallas_src>

<mosaic_0001>
module attributes {stable_mosaic.version = 11 : i64} {
  func.func @_model_fwd_kernel(%arg0: i32, %arg1: memref<8x32xf32, #tpu.memory_space<vmem>>, %arg2: memref<312x128xf32, #tpu.memory_space<vmem>>, %arg3: memref<8x64xf32, #tpu.memory_space<vmem>>) attributes {dimension_semantics = [#tpu.dimension_semantics<parallel>], iteration_bounds = array<i64: 1>, scalar_prefetch = 0 : i64, scratch_operands = 0 : i64, tpu.core_type = #tpu.core_type<tc>, window_params = [{transform_indices = @transform_0, window_bounds = array<i64: 8, 32>}, {pipeline_mode = #tpu.pipeline_mode<synchronous>, transform_indices = @transform_1, window_bounds = array<i64: 312, 128>}, {transform_indices = @transform_2, window_bounds = array<i64: 8, 64>}]} {
    %c0 = arith.constant 0 : index
    %c0_0 = arith.constant 0 : index
    %0 = vector.load %arg1[%c0, %c0_0] : memref<8x32xf32, #tpu.memory_space<vmem>>, vector<8x32xf32>
    %c0_1 = arith.constant 0 : index
    %c0_2 = arith.constant 0 : index
    %1 = vector.load %arg2[%c0_1, %c0_2] : memref<312x128xf32, #tpu.memory_space<vmem>>, vector<32x128xf32>
    %c32 = arith.constant 32 : index
    %c0_3 = arith.constant 0 : index
    %2 = vector.load %arg2[%c32, %c0_3] : memref<312x128xf32, #tpu.memory_space<vmem>>, vector<1x128xf32>
    %c40 = arith.constant 40 : index
    %c0_4 = arith.constant 0 : index
    %3 = vector.load %arg2[%c40, %c0_4] : memref<312x128xf32, #tpu.memory_space<vmem>>, vector<128x128xf32>
    %c168 = arith.constant 168 : index
    %c0_5 = arith.constant 0 : index
    %4 = vector.load %arg2[%c168, %c0_5] : memref<312x128xf32, #tpu.memory_space<vmem>>, vector<1x128xf32>
    %c176 = arith.constant 176 : index
    %c0_6 = arith.constant 0 : index
    %5 = vector.load %arg2[%c176, %c0_6] : memref<312x128xf32, #tpu.memory_space<vmem>>, vector<128x128xf32>
    %c304 = arith.constant 304 : index
    %c0_7 = arith.constant 0 : index
    %6 = vector.load %arg2[%c304, %c0_7] : memref<312x128xf32, #tpu.memory_space<vmem>>, vector<1x128xf32>
    %cst = arith.constant dense<0.000000e+00> : vector<8x128xf32>
    %7 = tpu.matmul %0, %1, %cst {dimension_numbers = #tpu.dot_dimension_numbers<[1], [0], [0], [1], [0, 0, 1, 1], [], []>} : vector<8x32xf32>, vector<32x128xf32>, vector<8x128xf32> -> vector<8x128xf32>
    %8 = vector.broadcast %2 : vector<1x128xf32> to vector<8x128xf32>
    %9 = arith.addf %7, %8 : vector<8x128xf32>
    %10 = arith.negf %9 : vector<8x128xf32>
    %11 = math.exp %10 : vector<8x128xf32>
    %cst_8 = arith.constant 1.000000e+00 : f32
    %12 = vector.broadcast %cst_8 : f32 to vector<8x128xf32>
    %13 = arith.addf %12, %11 : vector<8x128xf32>
    %14 = arith.divf %12, %13 : vector<8x128xf32>
    %cst_9 = arith.constant dense<0.000000e+00> : vector<8x128xf32>
    %15 = tpu.matmul %14, %3, %cst_9 {dimension_numbers = #tpu.dot_dimension_numbers<[1], [0], [0], [1], [0, 0, 1, 1], [], []>} : vector<8x128xf32>, vector<128x128xf32>, vector<8x128xf32> -> vector<8x128xf32>
    %16 = vector.broadcast %4 : vector<1x128xf32> to vector<8x128xf32>
    %17 = arith.addf %15, %16 : vector<8x128xf32>
    %18 = arith.negf %17 : vector<8x128xf32>
    %19 = math.exp %18 : vector<8x128xf32>
    %cst_10 = arith.constant 1.000000e+00 : f32
    %20 = vector.broadcast %cst_10 : f32 to vector<8x128xf32>
    %21 = arith.addf %20, %19 : vector<8x128xf32>
    %22 = arith.divf %20, %21 : vector<8x128xf32>
    %cst_11 = arith.constant dense<0.000000e+00> : vector<8x128xf32>
    %23 = tpu.matmul %22, %5, %cst_11 {dimension_numbers = #tpu.dot_dimension_numbers<[1], [0], [0], [1], [0, 0, 1, 1], [], []>} : vector<8x128xf32>, vector<128x128xf32>, vector<8x128xf32> -> vector<8x128xf32>
    %24 = vector.broadcast %6 : vector<1x128xf32> to vector<8x128xf32>
    %25 = arith.addf %23, %24 : vector<8x128xf32>
    %26 = vector.extract_strided_slice %14 {offsets = [0, 0], sizes = [8, 40], strides = [1, 1]} : vector<8x128xf32> to vector<8x40xf32>
    %c0_12 = arith.constant 0 : index
    %c0_13 = arith.constant 0 : index
    %27 = vector.load %arg3[%c0_12, %c0_13] : memref<8x64xf32, #tpu.memory_space<vmem>>, vector<8x40xf32>
    tpu.vector_store %arg3[%c0_12, %c0_13], %26 {strides = array<i32>} : memref<8x64xf32, #tpu.memory_space<vmem>>, vector<8x40xf32>,
    %28 = vector.extract_strided_slice %22 {offsets = [0, 0], sizes = [8, 1], strides = [1, 1]} : vector<8x128xf32> to vector<8x1xf32>
    %c0_14 = arith.constant 0 : index
    %c40_15 = arith.constant 40 : index
    %29 = vector.load %arg3[%c0_14, %c40_15] : memref<8x64xf32, #tpu.memory_space<vmem>>, vector<8x1xf32>
    tpu.vector_store %arg3[%c0_14, %c40_15], %28 {strides = array<i32>} : memref<8x64xf32, #tpu.memory_space<vmem>>, vector<8x1xf32>,
    %30 = vector.extract_strided_slice %25 {offsets = [0, 0], sizes = [8, 1], strides = [1, 1]} : vector<8x128xf32> to vector<8x1xf32>
    %31 = vector.extract_strided_slice %25 {offsets = [0, 1], sizes = [8, 1], strides = [1, 1]} : vector<8x128xf32> to vector<8x1xf32>
    %32 = arith.subf %30, %31 : vector<8x1xf32>
    %33 = arith.negf %32 : vector<8x1xf32>
    %34 = math.exp %33 : vector<8x1xf32>
    %cst_16 = arith.constant 1.000000e+00 : f32
    %35 = vector.broadcast %cst_16 : f32 to vector<8x1xf32>
    %36 = arith.addf %35, %34 : vector<8x1xf32>
    %37 = arith.divf %35, %36 : vector<8x1xf32>
    %c0_17 = arith.constant 0 : index
    %c41 = arith.constant 41 : index
    %38 = vector.load %arg3[%c0_17, %c41] : memref<8x64xf32, #tpu.memory_space<vmem>>, vector<8x1xf32>
    tpu.vector_store %arg3[%c0_17, %c41], %37 {strides = array<i32>} : memref<8x64xf32, #tpu.memory_space<vmem>>, vector<8x1xf32>,
    %cst_18 = arith.constant 1.000000e+00 : f32
    %39 = vector.broadcast %cst_18 : f32 to vector<8x1xf32>
    %40 = arith.subf %39, %37 : vector<8x1xf32>
    %c0_19 = arith.constant 0 : index
    %c42 = arith.constant 42 : index
    %41 = vector.load %arg3[%c0_19, %c42] : memref<8x64xf32, #tpu.memory_space<vmem>>, vector<8x1xf32>
    tpu.vector_store %arg3[%c0_19, %c42], %40 {strides = array<i32>} : memref<8x64xf32, #tpu.memory_space<vmem>>, vector<8x1xf32>,
    return
  }
  func.func @transform_0(%arg0: i32) -> (i32, i32) {
    %c0_i32 = arith.constant 0 : i32
    %c0_i32_0 = arith.constant 0 : i32
    return %arg0, %c0_i32 : i32, i32
  }
  func.func @transform_1(%arg0: i32) -> (i32, i32) {
    %c0_i32 = arith.constant 0 : i32
    %c0_i32_0 = arith.constant 0 : i32
    %c0_i32_1 = arith.constant 0 : i32
    return %c0_i32, %c0_i32_0 : i32, i32
  }
  func.func @transform_2(%arg0: i32) -> (i32, i32) {
    %c0_i32 = arith.constant 0 : i32
    %c0_i32_0 = arith.constant 0 : i32
    return %arg0, %c0_i32 : i32, i32
  }
}

</mosaic_0001>

<llo_original>
// kernel: _forward_packed.1
$region0: #{_forward_packed.1}
  #allocation0 [shape = 'u32[]', space=smem, size = 0x4, offset = 0x4, fixed_abs, tag = 'smem constant byte address 0x4 - core index']
  #allocation1 [shape = 'u32[144,128]{1,0:T(1,128)}', space=vmem, size = 0x12000, scoped, tag = 'internal scratch']
  %s0 = inlined_call_operand.hbm [shape: f32[8,32], index: 0, kind: input, shape index: {}]
  %s1 = inlined_call_operand.hbm [shape: f32[312,128], index: 1, kind: input, shape index: {}]
  %s2 = inlined_call_operand.vmem [shape: f32[8,64], index: 2, kind: output, shape index: {}]
  %s3 = sld [smem:[#allocation0]]
  $region26: #{_forward_packed.1} parent=0
    _
  %s5 = ssub.s32 1, %s3
  %s6 = scalar_select 0, %s5, %s3
  $region1: #{_forward_packed.1} parent=0
    #allocation2 [shape = 'u8[4096]{0}', space=vmem, size = 0x1000, scoped, tag = 'input window, operand 0, single buffered']
    #allocation3 [shape = 's32[1]{0}', space=sflag, size = 0x4, scoped, tag = 'scoped memory for _forward_packed.1']
    #allocation4 [shape = 'u8[159744]{0}', space=vmem, size = 0x27000, scoped, tag = 'input window, operand 1, single buffered']
    #allocation5 [shape = 's32[1]{0}', space=sflag, size = 0x4, scoped, tag = 'scoped memory for _forward_packed.1']
    %7 = vsyncpa [#allocation3], 0
    %8 = vsyncpa [#allocation5], 0
    // Predicated region
    $region2: #{_forward_packed.1} parent=1 // pred_check
      _
    $region3: #{_forward_packed.1} parent=1 // pred_check_branch
      %10 = sbr.rel (0) target = $region5
    $region4: #{_forward_packed.1} parent=1 // pred_region
      %s12 = ssub.s32 128, 128
      %13 = vsyncadd [#allocation3], %s12
      %s15 = sshll.u32 [#allocation2], 4
      %s16 = int_to_ptr.vmem [resolvable:$true] %s15
      %18 = dma.hbm_to_vmem [thread:$0]  %s0, 128, %s16, [#allocation3]
    $region5: #{_forward_packed.1} parent=1 // pred_fallthru
      _
    // Predicated region
    $region6: #{_forward_packed.1} parent=1 // pred_check
      _
    $region7: #{_forward_packed.1} parent=1 // pred_check_branch
      %20 = sbr.rel (0) target = $region9
    $region8: #{_forward_packed.1} parent=1 // pred_region
      %s22 = ssub.s32 4992, 4992
      %23 = vsyncadd [#allocation5], %s22
      %s24 = sshll.u32 [#allocation4], 4
      %s25 = int_to_ptr.vmem [resolvable:$true] %s24
      %30 = dma.hbm_to_vmem [thread:$0]  %s1, 4992, %s25, [#allocation5], 128, 128, 8
    $region9: #{_forward_packed.1} parent=1 // pred_fallthru
      _
    // Predicated region
    $region10: #{_forward_packed.1} parent=1 // pred_check
      _
    $region11: #{_forward_packed.1} parent=1 // pred_check_branch
      %32 = sbr.rel (0) target = $region13
    $region12: #{_forward_packed.1} parent=1 // pred_region
      %33 = dma.done [#allocation3], 128
    $region13: #{_forward_packed.1} parent=1 // pred_fallthru
      _
    // Predicated region
    $region14: #{_forward_packed.1} parent=1 // pred_check
      _
    $region15: #{_forward_packed.1} parent=1 // pred_check_branch
      %35 = sbr.rel (0) target = $region17
    $region16: #{_forward_packed.1} parent=1 // pred_region
      %36 = dma.done [#allocation5], 4992
    $region17: #{_forward_packed.1} parent=1 // pred_fallthru
      _
    %v37 = vld [vmem:[#allocation2] sm:$0xff]
    %v38 = vld [vmem:[#allocation4] sm:$0xff]
    %v39 = vld [vmem:[#allocation4 + $0x8] sm:$0xff]
    %v40 = vld [vmem:[#allocation4 + $0x10] sm:$0xff]
    %v41 = vld [vmem:[#allocation4 + $0x18] sm:$0xff]
    %v42 = vld [vmem:[#allocation4 + $0x20] sm:$0x1]
    %v43 = vld [vmem:[#allocation4 + $0x28] sm:$0xff]
    %v44 = vld [vmem:[#allocation4 + $0x30] sm:$0xff]
    %v45 = vld [vmem:[#allocation4 + $0x38] sm:$0xff]
    %v46 = vld [vmem:[#allocation4 + $0x40] sm:$0xff]
    %v47 = vld [vmem:[#allocation4 + $0x48] sm:$0xff]
    %v48 = vld [vmem:[#allocation4 + $0x50] sm:$0xff]
    %v49 = vld [vmem:[#allocation4 + $0x58] sm:$0xff]
    %v50 = vld [vmem:[#allocation4 + $0x60] sm:$0xff]
    %v51 = vld [vmem:[#allocation4 + $0x68] sm:$0xff]
    %v52 = vld [vmem:[#allocation4 + $0x70] sm:$0xff]
    %v53 = vld [vmem:[#allocation4 + $0x78] sm:$0xff]
    %v54 = vld [vmem:[#allocation4 + $0x80] sm:$0xff]
    %v55 = vld [vmem:[#allocation4 + $0x88] sm:$0xff]
    %v56 = vld [vmem:[#allocation4 + $0x90] sm:$0xff]
    %v57 = vld [vmem:[#allocation4 + $0x98] sm:$0xff]
    %v58 = vld [vmem:[#allocation4 + $0xa0] sm:$0xff]
    %v59 = vld [vmem:[#allocation4 + $0xa8] sm:$0x1]
    %v60 = vld [vmem:[#allocation4 + $0xb0] sm:$0xff]
    %v61 = vld [vmem:[#allocation4 + $0xb8] sm:$0xff]
    %v62 = vld [vmem:[#allocation4 + $0xc0] sm:$0xff]
    %v63 = vld [vmem:[#allocation4 + $0xc8] sm:$0xff]
    %v64 = vld [vmem:[#allocation4 + $0xd0] sm:$0xff]
    %v65 = vld [vmem:[#allocation4 + $0xd8] sm:$0xff]
    %v66 = vld [vmem:[#allocation4 + $0xe0] sm:$0xff]
    %v67 = vld [vmem:[#allocation4 + $0xe8] sm:$0xff]
    %v68 = vld [vmem:[#allocation4 + $0xf0] sm:$0xff]
    %v69 = vld [vmem:[#allocation4 + $0xf8] sm:$0xff]
    %v70 = vld [vmem:[#allocation4 + $0x100] sm:$0xff]
    %v71 = vld [vmem:[#allocation4 + $0x108] sm:$0xff]
    %v72 = vld [vmem:[#allocation4 + $0x110] sm:$0xff]
    %v73 = vld [vmem:[#allocation4 + $0x118] sm:$0xff]
    %v74 = vld [vmem:[#allocation4 + $0x120] sm:$0xff]
    %v75 = vld [vmem:[#allocation4 + $0x128] sm:$0xff]
    %v76 = vld [vmem:[#allocation4 + $0x130] sm:$0x1]
    %v77 = vlaneseq
    %v78 = vshrl.u32 %v77, 7
    %v79 = vsub.s32 0, %v78
    %v80 = vrot.slane %v42, %v79
    %vm81 = vcmask 261120
    %v83 = vsel %vm81, %v37, 0
    %85 = vmatprep.subr.mxu0 0.0
    %86 = vmatpush1.msra.mxu0 %v38
    %87 = vmatprep.subr.mxu0 0.0
    %88 = vmatpush1.msra.mxu0 %v39
    %89 = vmatprep.subr.mxu0 0.0
    %90 = vmatpush1.msra.mxu0 %v40
    %91 = vmatprep.subr.mxu0 0.0
    %92 = vmatpush1.msra.mxu0 %v41
    %93 = vmatprep.subr.mxu0 0.0
    %94 = vmatpush1.msra.mxu0 0.0
    %95 = vmatprep.subr.mxu0 0.0
    %96 = vmatpush1.msra.mxu0 0.0
    %97 = vmatprep.subr.mxu0 0.0
    %98 = vmatpush1.msra.mxu0 0.0
    %99 = vmatprep.subr.mxu0 0.0
    %100 = vmatpush1.msra.mxu0 0.0
    %101 = vmatprep.subr.mxu0 0.0
    %102 = vmatpush1.msra.mxu0 0.0
    %103 = vmatprep.subr.mxu0 0.0
    %104 = vmatpush1.msra.mxu0 0.0
    %105 = vmatprep.subr.mxu0 0.0
    %106 = vmatpush1.msra.mxu0 0.0
    %107 = vmatprep.subr.mxu0 0.0
    %108 = vmatpush1.msra.mxu0 0.0
    %109 = vmatprep.subr.mxu0 0.0
    %110 = vmatpush1.msra.mxu0 0.0
    %111 = vmatprep.subr.mxu0 0.0
    %112 = vmatpush1.msra.mxu0 0.0
    %113 = vmatprep.subr.mxu0 0.0
    %114 = vmatpush1.msra.mxu0 0.0
    %115 = vmatprep.subr.mxu0 0.0
    %116 = vmatpush1.msra.mxu0 0.0
    %117 = vmatprep.subr.mxu0 0.0
    %118 = vmatpush1.msra.mxu0 0.0
    %119 = vmatprep.subr.mxu0 0.0
    %120 = vmatpush1.msra.mxu0 0.0
    %121 = vmatprep.subr.mxu0 0.0
    %122 = vmatpush1.msra.mxu0 0.0
    %123 = vmatprep.subr.mxu0 0.0
    %124 = vmatpush1.msra.mxu0 0.0
    %125 = vmatprep.subr.mxu0 0.0
    %126 = vmatpush1.msra.mxu0 0.0
    %127 = vmatprep.subr.mxu0 0.0
    %128 = vmatpush1.msra.mxu0 0.0
    %129 = vmatprep.subr.mxu0 0.0
    %130 = vmatpush1.msra.mxu0 0.0
    %131 = vmatprep.subr.mxu0 0.0
    %132 = vmatpush1.msra.mxu0 0.0
    %133 = vmatprep.subr.mxu0 0.0
    %134 = vmatpush1.msra.mxu0 0.0
    %135 = vmatprep.subr.mxu0 0.0
    %136 = vmatpush1.msra.mxu0 0.0
    %137 = vmatprep.subr.mxu0 0.0
    %138 = vmatpush1.msra.mxu0 0.0
    %139 = vmatprep.subr.mxu0 0.0
    %140 = vmatpush1.msra.mxu0 0.0
    %141 = vmatprep.subr.mxu0 0.0
    %142 = vmatpush1.msra.mxu0 0.0
    %143 = vmatprep.subr.mxu0 0.0
    %144 = vmatpush1.msra.mxu0 0.0
    %145 = vmatprep.subr.mxu0 0.0
    %146 = vmatpush1.msra.mxu0 0.0
    %147 = vmatprep.subr.mxu0 0.0
    %148 = vmatpush1.msra.mxu0 0.0
    %149 = vmatprep.mubr.f32.mxu0 0.0
    %150 = vmatmul.mubr.f32.gmra.mrb[0].mxu0 %v83
    %v151 = vpop.f32.mrb[0].mxu0
    %v152 = vadd.f32 %v80, %v151
    %v153 = vpop.f32.mrb[0].mxu0
    %154 = vdwg.mxu0
    %v155 = vxor.u32 %v152, 2147483648
    %v156 = vmul.f32 %v155, 1.442695
    %v157 = vpow.pop %v156
    %v158 = vadd.f32 %v157, 1.0
    %v159 = vrcp.pop %v158
    %v160 = vmul.f32 1.0, %v159
    %v161 = vlaneseq
    %v162 = vshrl.u32 %v161, 7
    %v163 = vsub.s32 0, %v162
    %v164 = vrot.slane %v59, %v163
    %165 = vmatprep.subr.mxu0 0.0
    %166 = vmatpush1.msra.mxu0 %v43
    %167 = vmatprep.subr.mxu0 0.0
    %168 = vmatpush1.msra.mxu0 %v44
    %169 = vmatprep.subr.mxu0 0.0
    %170 = vmatpush1.msra.mxu0 %v45
    %171 = vmatprep.subr.mxu0 0.0
    %172 = vmatpush1.msra.mxu0 %v46
    %173 = vmatprep.subr.mxu0 0.0
    %174 = vmatpush1.msra.mxu0 %v47
    %175 = vmatprep.subr.mxu0 0.0
    %176 = vmatpush1.msra.mxu0 %v48
    %177 = vmatprep.subr.mxu0 0.0
    %178 = vmatpush1.msra.mxu0 %v49
    %179 = vmatprep.subr.mxu0 0.0
    %180 = vmatpush1.msra.mxu0 %v50
    %181 = vmatprep.subr.mxu0 0.0
    %182 = vmatpush1.msra.mxu0 %v51
    %183 = vmatprep.subr.mxu0 0.0
    %184 = vmatpush1.msra.mxu0 %v52
    %185 = vmatprep.subr.mxu0 0.0
    %186 = vmatpush1.msra.mxu0 %v53
    %187 = vmatprep.subr.mxu0 0.0
    %188 = vmatpush1.msra.mxu0 %v54
    %189 = vmatprep.subr.mxu0 0.0
    %190 = vmatpush1.msra.mxu0 %v55
    %191 = vmatprep.subr.mxu0 0.0
    %192 = vmatpush1.msra.mxu0 %v56
    %193 = vmatprep.subr.mxu0 0.0
    %194 = vmatpush1.msra.mxu0 %v57
    %195 = vmatprep.subr.mxu0 0.0
    %196 = vmatpush1.msra.mxu0 %v58
    %197 = vmatprep.subr.mxu0 0.0
    %198 = vmatpush1.msra.mxu0 0.0
    %199 = vmatprep.subr.mxu0 0.0
    %200 = vmatpush1.msra.mxu0 0.0
    %201 = vmatprep.subr.mxu0 0.0
    %202 = vmatpush1.msra.mxu0 0.0
    %203 = vmatprep.subr.mxu0 0.0
    %204 = vmatpush1.msra.mxu0 0.0
    %205 = vmatprep.subr.mxu0 0.0
    %206 = vmatpush1.msra.mxu0 0.0
    %207 = vmatprep.subr.mxu0 0.0
    %208 = vmatpush1.msra.mxu0 0.0
    %209 = vmatprep.subr.mxu0 0.0
    %210 = vmatpush1.msra.mxu0 0.0
    %211 = vmatprep.subr.mxu0 0.0
    %212 = vmatpush1.msra.mxu0 0.0
    %213 = vmatprep.subr.mxu0 0.0
    %214 = vmatpush1.msra.mxu0 0.0
    %215 = vmatprep.subr.mxu0 0.0
    %216 = vmatpush1.msra.mxu0 0.0
    %217 = vmatprep.subr.mxu0 0.0
    %218 = vmatpush1.msra.mxu0 0.0
    %219 = vmatprep.subr.mxu0 0.0
    %220 = vmatpush1.msra.mxu0 0.0
    %221 = vmatprep.subr.mxu0 0.0
    %222 = vmatpush1.msra.mxu0 0.0
    %223 = vmatprep.subr.mxu0 0.0
    %224 = vmatpush1.msra.mxu0 0.0
    %225 = vmatprep.subr.mxu0 0.0
    %226 = vmatpush1.msra.mxu0 0.0
    %227 = vmatprep.subr.mxu0 0.0
    %228 = vmatpush1.msra.mxu0 0.0
    %229 = vmatprep.mubr.f32.mxu0 0.0
    %230 = vmatmul.mubr.f32.gmra.mrb[0].mxu0 %v160
    %v231 = vpop.f32.mrb[0].mxu0
    %v232 = vadd.f32 %v164, %v231
    %v233 = vpop.f32.mrb[0].mxu0
    %234 = vdwg.mxu0
    %v235 = vxor.u32 %v232, 2147483648
    %v236 = vmul.f32 %v235, 1.442695
    %v237 = vpow.pop %v236
    %v238 = vadd.f32 %v237, 1.0
    %v239 = vrcp.pop %v238
    %v240 = vmul.f32 1.0, %v239
    %v241 = vlaneseq
    %v242 = vshrl.u32 %v241, 7
    %v243 = vsub.s32 0, %v242
    %v244 = vrot.slane %v76, %v243
    %245 = vmatprep.subr.mxu0 0.0
    %246 = vmatpush1.msra.mxu0 %v60
    %247 = vmatprep.subr.mxu0 0.0
    %248 = vmatpush1.msra.mxu0 %v61
    %249 = vmatprep.subr.mxu0 0.0
    %250 = vmatpush1.msra.mxu0 %v62
    %251 = vmatprep.subr.mxu0 0.0
    %252 = vmatpush1.msra.mxu0 %v63
    %253 = vmatprep.subr.mxu0 0.0
    %254 = vmatpush1.msra.mxu0 %v64
    %255 = vmatprep.subr.mxu0 0.0
    %256 = vmatpush1.msra.mxu0 %v65
    %257 = vmatprep.subr.mxu0 0.0
    %258 = vmatpush1.msra.mxu0 %v66
    %259 = vmatprep.subr.mxu0 0.0
    %260 = vmatpush1.msra.mxu0 %v67
    %261 = vmatprep.subr.mxu0 0.0
    %262 = vmatpush1.msra.mxu0 %v68
    %263 = vmatprep.subr.mxu0 0.0
    %264 = vmatpush1.msra.mxu0 %v69
    %265 = vmatprep.subr.mxu0 0.0
    %266 = vmatpush1.msra.mxu0 %v70
    %267 = vmatprep.subr.mxu0 0.0
    %268 = vmatpush1.msra.mxu0 %v71
    %269 = vmatprep.subr.mxu0 0.0
    %270 = vmatpush1.msra.mxu0 %v72
    %271 = vmatprep.subr.mxu0 0.0
    %272 = vmatpush1.msra.mxu0 %v73
    %273 = vmatprep.subr.mxu0 0.0
    %274 = vmatpush1.msra.mxu0 %v74
    %275 = vmatprep.subr.mxu0 0.0
    %276 = vmatpush1.msra.mxu0 %v75
    %277 = vmatprep.subr.mxu0 0.0
    %278 = vmatpush1.msra.mxu0 0.0
    %279 = vmatprep.subr.mxu0 0.0
    %280 = vmatpush1.msra.mxu0 0.0
    %281 = vmatprep.subr.mxu0 0.0
    %282 = vmatpush1.msra.mxu0 0.0
    %283 = vmatprep.subr.mxu0 0.0
    %284 = vmatpush1.msra.mxu0 0.0
    %285 = vmatprep.subr.mxu0 0.0
    %286 = vmatpush1.msra.mxu0 0.0
    %287 = vmatprep.subr.mxu0 0.0
    %288 = vmatpush1.msra.mxu0 0.0
    %289 = vmatprep.subr.mxu0 0.0
    %290 = vmatpush1.msra.mxu0 0.0
    %291 = vmatprep.subr.mxu0 0.0
    %292 = vmatpush1.msra.mxu0 0.0
    %293 = vmatprep.subr.mxu0 0.0
    %294 = vmatpush1.msra.mxu0 0.0
    %295 = vmatprep.subr.mxu0 0.0
    %296 = vmatpush1.msra.mxu0 0.0
    %297 = vmatprep.subr.mxu0 0.0
    %298 = vmatpush1.msra.mxu0 0.0
    %299 = vmatprep.subr.mxu0 0.0
    %300 = vmatpush1.msra.mxu0 0.0
    %301 = vmatprep.subr.mxu0 0.0
    %302 = vmatpush1.msra.mxu0 0.0
    %303 = vmatprep.subr.mxu0 0.0
    %304 = vmatpush1.msra.mxu0 0.0
    %305 = vmatprep.subr.mxu0 0.0
    %306 = vmatpush1.msra.mxu0 0.0
    %307 = vmatprep.subr.mxu0 0.0
    %308 = vmatpush1.msra.mxu0 0.0
    %309 = vmatprep.mubr.f32.mxu0 0.0
    %310 = vmatmul.mubr.f32.gmra.mrb[0].mxu0 %v240
    %v311 = vpop.f32.mrb[0].mxu0
    %v312 = vadd.f32 %v244, %v311
    %v313 = vpop.f32.mrb[0].mxu0
    %314 = vdwg.mxu0
    %vm315 = vcmask 326656
    %316 = vst.msk [vmem:[%s2] sm:$0xff] %vm315, %v160
    %318 = vrot.lane.b32.xlu0 %v240, 40
    %v319 = vpop.permute.xlu0 %318
    %vm321 = vcmask 335168
    %322 = vst.msk [vmem:[%s2] sm:$0xff] %vm321, %v319
    %324 = vrot.lane.b32.xlu0 %v312, 127
    %v325 = vpop.permute.xlu0 %324
    %v327 = vsub.f32 %v312, %v325
    %v328 = vxor.u32 %v327, 2147483648
    %v329 = vmul.f32 %v328, 1.442695
    %v330 = vpow.pop %v329
    %v331 = vadd.f32 %v330, 1.0
    %v332 = vrcp.pop %v331
    %v333 = vmul.f32 1.0, %v332
    %335 = vrot.lane.b32.xlu0 %v333, 41
    %v336 = vpop.permute.xlu0 %335
    %vm338 = vcmask 343368
    %339 = vst.msk [vmem:[%s2] sm:$0xff] %vm338, %v336
    %v340 = vsub.f32 1.0, %v333
    %342 = vrot.lane.b32.xlu0 %v340, 42
    %v343 = vpop.permute.xlu0 %342
    %vm345 = vcmask 351568
    %346 = vst.msk [vmem:[%s2] sm:$0xff] %vm345, %v343
    // Predicated region
    $region18: #{_forward_packed.1} parent=1 // pred_check
      _
    $region19: #{_forward_packed.1} parent=1 // pred_check_branch
      %348 = sbr.rel (0) target = $region21
    $region20: #{_forward_packed.1} parent=1 // pred_region
      _
    $region21: #{_forward_packed.1} parent=1 // pred_fallthru
      _
    // Predicated region
    $region22: #{_forward_packed.1} parent=1 // pred_check
      _
    $region23: #{_forward_packed.1} parent=1 // pred_check_branch
      %350 = sbr.rel (0) target = $region25
    $region24: #{_forward_packed.1} parent=1 // pred_region
      _
    $region25: #{_forward_packed.1} parent=1 // pred_fallthru
      _
    %351 = vsyncpa [#allocation3], 1
    %352 = vsyncpa [#allocation5], 1

</llo_original>
